<compile_context>
chip_gen: v6e
topology: v6e:2x2x1
jax: 0.10.0
libtpu: 0.0.40
codegen_flags: <defaults>
</compile_context>

<pallas_src>
from functools import partial

import jax
import jax.numpy as jnp
from jax.experimental import pallas as pl
from jax.experimental.pallas import tpu as pltpu


def _tpu_budgets():
    """Per-generation block / VMEM / dispatch budgets."""
    vmem_cap = 0
    try:
        info = pltpu.get_tpu_info()
        vmem_cap = int(getattr(info, "vmem_capacity_bytes", 0) or
                       getattr(info, "vmem_bytes", 0) or 0)
    except Exception:
        vmem_cap = 0
    if vmem_cap >= (96 << 20):
        # v5e / v6e: 128 MiB physical VMEM, lower HBM bandwidth.
        return dict(vmem_limit_bytes=64 << 20,
                    target_block_bytes=8 << 20,
                    min_pallas_bytes=1 << 20)
    # v7x-class (64 MiB per TensorCore) or unknown -> conservative everywhere.
    return dict(vmem_limit_bytes=32 << 20,
                target_block_bytes=4 << 20,
                min_pallas_bytes=4 << 20)


def _pick_block_rows(m_rows: int, bytes_per_row: int, itemsize: int,
                     target_block_bytes: int) -> int:
    """Rows per block: ~target-sized input blocks, >=8 pipelined grid steps
    when there is enough work (both v7x cores get >=4 steps each),
    dtype-aware sublane rounding, preferring exact divisors of m_rows."""
    sub = max(8, (8 * 4) // max(1, itemsize))       # 8 f32 / 16 bf16 / 32 int8
    r = max(1, min(m_rows, target_block_bytes // max(1, bytes_per_row)))
    if m_rows >= 8 * sub:
        r = min(r, max(sub, m_rows // 8))           # >= 8 grid steps
    if r >= sub:
        r -= r % sub                                # sublane-tile multiple
    r = max(1, r)
    for cand in range(r, max(0, r - 4 * sub), -1):  # prefer no ragged tail
        if m_rows % cand == 0 and (cand % sub == 0 or cand < sub):
            return cand
    return r                                        # ragged tail is masked


def _maxpool2x2_fused_kernel(x_ref, sel_ref, o_ref):
    """x_ref:   (R, 2*W)  each row = [top input row | bottom input row].
    sel_ref: (W-1, Wo) static 0/1 compaction matrix, sel[2j, j] = 1.
    o_ref:   (R, Wo)   pooled output rows.
    """
    w = sel_ref.shape[0] + 1
    # Vertical fold of the two window rows (VPU).
    v = jnp.maximum(x_ref[:, :w], x_ref[:, w:])
    # Horizontal pair max; valid results live at even lanes (VPU + lane shift).
    h = jnp.maximum(v[:, : w - 1], v[:, 1:])
    # Even-lane compaction on the MXU: exactly one 1.0 per output column, so
    # the result is bit-exact for float inputs (f32 accumulate).
    out = jnp.dot(h, sel_ref[...], preferred_element_type=jnp.float32)
    o_ref[...] = out.astype(o_ref.dtype)


def _maxpool2x2_pallas(x: jax.Array, budgets) -> jax.Array:
    n, c, h, w = x.shape                      # already trimmed to even H, W
    ho, wo = h // 2, w // 2
    m = n * c * ho                            # one row per 2x2 window-row
    itemsize = x.dtype.itemsize

    # Free view: row r = [top row | bottom row] of pooling-window row r.
    x2 = x.reshape(m, 2 * w)

    # Static selection matrix (kept resident in VMEM across grid steps).
    sel = (jnp.arange(w - 1, dtype=jnp.int32)[:, None]
           == 2 * jnp.arange(wo, dtype=jnp.int32)[None, :]).astype(x.dtype)

    rows = _pick_block_rows(m, 2 * w * itemsize, itemsize,
                            budgets["target_block_bytes"])
    grid = (pl.cdiv(m, rows),)

    cost = pl.CostEstimate(
        flops=int(3 * m * wo + 2 * m * (w - 1) * wo),
        bytes_accessed=int((m * 2 * w + (w - 1) * wo + m * wo) * itemsize),
        transcendentals=0,
    )

    out = pl.pallas_call(
        _maxpool2x2_fused_kernel,
        out_shape=jax.ShapeDtypeStruct((m, wo), x.dtype),
        grid=grid,
        in_specs=[
            pl.BlockSpec((rows, 2 * w), lambda i: (i, 0)),
            pl.BlockSpec((w - 1, wo), lambda i: (0, 0)),
        ],
        out_specs=pl.BlockSpec((rows, wo), lambda i: (i, 0)),
        compiler_params=pltpu.CompilerParams(
            dimension_semantics=("parallel",),
            vmem_limit_bytes=budgets["vmem_limit_bytes"],
        ),
        cost_estimate=cost,
    )(x2, sel)

    return out.reshape(n, c, ho, wo)


def _maxpool2x2_xla(x: jax.Array) -> jax.Array:
    """lax.reduce_window fallback (tiny / non-float); also the test reference."""
    if jnp.issubdtype(x.dtype, jnp.floating):
        init = jnp.array(-jnp.inf, dtype=x.dtype)
    elif x.dtype == jnp.bool_:
        init = jnp.array(False, dtype=x.dtype)
    else:
        init = jnp.array(jnp.iinfo(x.dtype).min, dtype=x.dtype)
    return jax.lax.reduce_window(
        x, init, jax.lax.max,
        window_dimensions=(1, 1, 2, 2),
        window_strides=(1, 1, 2, 2),
        padding="VALID",
    )


@partial(jax.jit, static_argnames=("use_pallas",))
def downsample_maxpool2x2(x: jax.Array, *, use_pallas=None) -> jax.Array:
    """MaxPool2d(kernel_size=2, stride=2) over an NCHW tensor (DownSample.forward)."""
    n, c, h, w = x.shape
    ho, wo = h // 2, w // 2
    if ho == 0 or wo == 0:
        return jnp.zeros((n, c, ho, wo), x.dtype)
    # nn.MaxPool2d(2) floors odd spatial dims; trim to match (no-op when even).
    x = x[:, :, : 2 * ho, : 2 * wo]

    budgets = _tpu_budgets()
    is_float = bool(jnp.issubdtype(x.dtype, jnp.floating))
    if use_pallas is None:
        use_pallas = is_float and (x.size * x.dtype.itemsize
                                   >= budgets["min_pallas_bytes"])
    if not use_pallas or not is_float:
        return _maxpool2x2_xla(x)
    return _maxpool2x2_pallas(x, budgets)


if __name__ == "__main__":
    key = jax.random.PRNGKey(0)
    k1, k2 = jax.random.split(key)

    # Spec shape implied by the module's forward: NCHW = (2, 4, 16, 16).
    # Force the Pallas path so the fused kernel is exercised on the spec shape.
    x_small = jax.random.normal(k1, (2, 4, 16, 16), dtype=jnp.float32)
    y_small = jax.block_until_ready(
        downsample_maxpool2x2(x_small, use_pallas=True))
    assert y_small.shape == (2, 4, 8, 8), y_small.shape
    assert jnp.allclose(y_small, _maxpool2x2_xla(x_small)), "mismatch (small)"

    # Larger lane-dense shape exercising the tiled "parallel" pipeline and the
    # fused MXU compaction (8 grid steps of (128, 512) input blocks).
    x_big = jax.random.normal(k2, (2, 8, 128, 256), dtype=jnp.float32)
    y_big = jax.block_until_ready(
        downsample_maxpool2x2(x_big, use_pallas=True))
    assert y_big.shape == (2, 8, 64, 128), y_big.shape
    assert jnp.allclose(y_big, _maxpool2x2_xla(x_big)), "mismatch (big)"

    print("KERNEL_OK")
</pallas_src>

<mosaic_0001>
module attributes {stable_mosaic.version = 11 : i64} {
  func.func @_maxpool2x2_fused_kernel(%arg0: i32, %arg1: memref<8x32xf32, #tpu.memory_space<vmem>>, %arg2: memref<15x8xf32, #tpu.memory_space<vmem>>, %arg3: memref<8x8xf32, #tpu.memory_space<vmem>>) attributes {dimension_semantics = [#tpu.dimension_semantics<parallel>], iteration_bounds = array<i64: 8>, scalar_prefetch = 0 : i64, scratch_operands = 0 : i64, tpu.core_type = #tpu.core_type<tc>, window_params = [{transform_indices = @transform_0, window_bounds = array<i64: 8, 32>}, {pipeline_mode = #tpu.pipeline_mode<synchronous>, transform_indices = @transform_1, window_bounds = array<i64: 15, 8>}, {transform_indices = @transform_2, window_bounds = array<i64: 8, 8>}]} {
    %c0 = arith.constant 0 : index
    %c0_0 = arith.constant 0 : index
    %0 = vector.load %arg1[%c0, %c0_0] : memref<8x32xf32, #tpu.memory_space<vmem>>, vector<8x16xf32>
    %c0_1 = arith.constant 0 : index
    %c16 = arith.constant 16 : index
    %1 = vector.load %arg1[%c0_1, %c16] : memref<8x32xf32, #tpu.memory_space<vmem>>, vector<8x16xf32>
    %2 = arith.maximumf %0, %1 : vector<8x16xf32>
    %3 = vector.extract_strided_slice %2 {offsets = [0, 0], sizes = [8, 15], strides = [1, 1]} : vector<8x16xf32> to vector<8x15xf32>
    %4 = vector.extract_strided_slice %2 {offsets = [0, 1], sizes = [8, 15], strides = [1, 1]} : vector<8x16xf32> to vector<8x15xf32>
    %5 = arith.maximumf %3, %4 : vector<8x15xf32>
    %c0_2 = arith.constant 0 : index
    %c0_3 = arith.constant 0 : index
    %6 = vector.load %arg2[%c0_2, %c0_3] : memref<15x8xf32, #tpu.memory_space<vmem>>, vector<15x8xf32>
    %cst = arith.constant dense<0.000000e+00> : vector<8x8xf32>
    %7 = tpu.matmul %5, %6, %cst {dimension_numbers = #tpu.dot_dimension_numbers<[1], [0], [0], [1], [0, 0, 1, 1], [], []>} : vector<8x15xf32>, vector<15x8xf32>, vector<8x8xf32> -> vector<8x8xf32>
    %c0_4 = arith.constant 0 : index
    %c0_5 = arith.constant 0 : index
    %8 = vector.load %arg3[%c0_4, %c0_5] : memref<8x8xf32, #tpu.memory_space<vmem>>, vector<8x8xf32>
    tpu.vector_store %arg3[%c0_4, %c0_5], %7 {strides = array<i32>} : memref<8x8xf32, #tpu.memory_space<vmem>>, vector<8x8xf32>,
    return
  }
  func.func @transform_0(%arg0: i32) -> (i32, i32) {
    %c0_i32 = arith.constant 0 : i32
    %c0_i32_0 = arith.constant 0 : i32
    return %arg0, %c0_i32 : i32, i32
  }
  func.func @transform_1(%arg0: i32) -> (i32, i32) {
    %c0_i32 = arith.constant 0 : i32
    %c0_i32_0 = arith.constant 0 : i32
    %c0_i32_1 = arith.constant 0 : i32
    return %c0_i32, %c0_i32_0 : i32, i32
  }
  func.func @transform_2(%arg0: i32) -> (i32, i32) {
    %c0_i32 = arith.constant 0 : i32
    %c0_i32_0 = arith.constant 0 : i32
    return %arg0, %c0_i32 : i32, i32
  }
}

</mosaic_0001>

<llo_original>
// kernel: downsample_maxpool2x2.1
$region0: #{downsample_maxpool2x2.1}
  #allocation0 [shape = 'u32[]', space=smem, size = 0x4, offset = 0x4, fixed_abs, tag = 'smem constant byte address 0x4 - core index']
  #allocation1 [shape = 'u32[144,128]{1,0:T(1,128)}', space=vmem, size = 0x12000, scoped, tag = 'internal scratch']
  %s0 = inlined_call_operand.vmem [shape: f32[64,32], index: 0, kind: input, shape index: {}]
  %s1 = inlined_call_operand.vmem [shape: f32[15,8], index: 1, kind: input, shape index: {}]
  %s2 = inlined_call_operand.hbm [shape: f32[64,8], index: 2, kind: output, shape index: {}]
  %s3 = sld [smem:[#allocation0]]
  $region41: #{downsample_maxpool2x2.1} parent=0
    _
  %s5 = ssub.s32 1, %s3
  %s6 = scalar_select 0, %s5, %s3
  $region1: #{downsample_maxpool2x2.1} parent=0
    #allocation2 [shape = 'u8[8192]{0}', space=vmem, size = 0x2000, scoped, tag = 'output window, operand 0']
    #allocation3 [shape = 's32[2]{0}', space=sflag, size = 0x8, scoped, tag = 'scoped memory for downsample_maxpool2x2.1']
    %7 = vsyncpa [#allocation3], 0
    %s8 = scalar_lea.sflag [#allocation3], 1
    %9 = vsyncpa %s8, 0
    loop: start=0, step=1, limit=10
    $region2: #{downsample_maxpool2x2.1} parent=1 // loop_pre_header
      _
    $region3: #{downsample_maxpool2x2.1} parent=1 // loop_header
      %s11 = sphi 0, %s15
      %p12 = scmp.ge.s32.totalorder %s11, 10
      %s21 = sphi 0, %s23
      %s24 = sphi 0, %s21
      %s25 = sphi 0, %s24
      %s41 = sphi 0, %s25
      %s45 = sphi 0, %s45
      %s47 = sphi 0, %s45
      %s48 = sphi 0, %s47
      %s62 = sphi 0, %s48
      %s68 = sphi 0, %s70
      %s71 = sphi 0, %s68
      %s72 = sphi 0, %s71
      %s88 = sphi 0, %s72
    $region4: #{downsample_maxpool2x2.1} parent=1 // loop_header_branch
      %14 = sbr.rel (%p12) target = $region8
    $region5: #{downsample_maxpool2x2.1} parent=1 // loop_body
      %s16 = ssub.s32 %s11, 1
      %s17 = ssub.s32 %s11, 2
      %s18 = sadd.s32 %s11, 1
      %s19 = ssub.s32 %s11, %s18
      %p20 = scmp.eq.s32.totalorder %s19, 0
      %s22 = sadd.s32 %s21, 1
      %s23 = scalar_select %p20, %s21, %s22
      %p26 = pneg %p20
      %p27 = scmp.eq.s32.totalorder %s11, 7
      %p28 = por %p26, %p27
      %p29 = scmp.ne.s32.totalorder %s21, %s24
      %p30 = scmp.eq.s32.totalorder %s11, 0
      %p31 = por %p29, %p30
      %p32 = scmp.ne.s32.totalorder %s21, %s24
      %p33 = scmp.eq.s32.totalorder %s16, 7
      %p34 = por %p32, %p33
      %p35 = scmp.ne.s32.totalorder %s24, %s25
      %p36 = scmp.eq.s32.totalorder %s16, 0
      %p37 = por %p35, %p36
      %p38 = scmp.ne.s32.totalorder %s24, %s25
      %p39 = scmp.eq.s32.totalorder %s17, 7
      %p40 = por %p38, %p39
      %p42 = scmp.ne.s32.totalorder %s25, %s41
      %p43 = scmp.eq.s32.totalorder %s17, 0
      %p44 = por %p42, %p43
      %s46 = sadd.s32 %s45, 1
      %p49 = scmp.eq.s32.totalorder %s11, 7
      %p50 = scmp.ne.s32.totalorder %s45, %s47
      %p51 = scmp.eq.s32.totalorder %s11, 0
      %p52 = por %p50, %p51
      %p53 = scmp.ne.s32.totalorder %s45, %s47
      %p54 = scmp.eq.s32.totalorder %s16, 7
      %p55 = por %p53, %p54
      %p56 = scmp.ne.s32.totalorder %s47, %s48
      %p57 = scmp.eq.s32.totalorder %s16, 0
      %p58 = por %p56, %p57
      %p59 = scmp.ne.s32.totalorder %s47, %s48
      %p60 = scmp.eq.s32.totalorder %s17, 7
      %p61 = por %p59, %p60
      %p63 = scmp.ne.s32.totalorder %s48, %s62
      %p64 = scmp.eq.s32.totalorder %s17, 0
      %p65 = por %p63, %p64
      %s66 = ssub.s32 %s11, %s18
      %p67 = scmp.eq.s32.totalorder %s66, 0
      %s69 = sadd.s32 %s68, 1
      %s70 = scalar_select %p67, %s68, %s69
      %p73 = pneg %p67
      %p74 = scmp.eq.s32.totalorder %s11, 7
      %p75 = por %p73, %p74
      %p76 = scmp.ne.s32.totalorder %s68, %s71
      %p77 = scmp.eq.s32.totalorder %s11, 0
      %p78 = por %p76, %p77
      %p79 = scmp.ne.s32.totalorder %s68, %s71
      %p80 = scmp.eq.s32.totalorder %s16, 7
      %p81 = por %p79, %p80
      %p82 = scmp.ne.s32.totalorder %s71, %s72
      %p83 = scmp.eq.s32.totalorder %s16, 0
      %p84 = por %p82, %p83
      %p85 = scmp.ne.s32.totalorder %s71, %s72
      %p86 = scmp.eq.s32.totalorder %s17, 7
      %p87 = por %p85, %p86
      %p89 = scmp.ne.s32.totalorder %s72, %s88
      %p90 = scmp.eq.s32.totalorder %s17, 0
      %p91 = por %p89, %p90
      %p92 = scmp.le.s32.totalorder 1, %s11
      %p93 = scmp.lt.s32.totalorder %s11, 9
      %p94 = pnand %p92, %p93
      %p95 = pneg %p94
      // Predicated region
      $region9: #{downsample_maxpool2x2.1} parent=5 // pred_check
        _
      $region10: #{downsample_maxpool2x2.1} parent=5 // pred_check_branch
        %97 = sbr.rel (%p94) target = $region12
      $region11: #{downsample_maxpool2x2.1} parent=5 // pred_region
        %s98 = ssub.s32 %s11, 1
        // Predicated region
        $region13: #{downsample_maxpool2x2.1} parent=11 // pred_check
          %p99 = pneg %p58
        $region14: #{downsample_maxpool2x2.1} parent=11 // pred_check_branch
          %101 = sbr.rel (%p99) target = $region16
        $region15: #{downsample_maxpool2x2.1} parent=11 // pred_region
          _
        $region16: #{downsample_maxpool2x2.1} parent=11 // pred_fallthru
          _
      $region12: #{downsample_maxpool2x2.1} parent=5 // pred_fallthru
        _
      %p102 = scmp.lt.s32.totalorder %s11, 8
      // Predicated region
      $region17: #{downsample_maxpool2x2.1} parent=5 // pred_check
        %p103 = pneg %p102
      $region18: #{downsample_maxpool2x2.1} parent=5 // pred_check_branch
        %105 = sbr.rel (%p103) target = $region20
      $region19: #{downsample_maxpool2x2.1} parent=5 // pred_region
        // Predicated region
        $region21: #{downsample_maxpool2x2.1} parent=19 // pred_check
          %p106 = pneg %p31
        $region22: #{downsample_maxpool2x2.1} parent=19 // pred_check_branch
          %108 = sbr.rel (%p106) target = $region24
        $region23: #{downsample_maxpool2x2.1} parent=19 // pred_region
          %p109 = scmp.lt.s32.totalorder %s11, 7
          %s110 = scalar_select %p109, %s11, 7
          %s111 = smul.addr %s110, 8
          %s112 = scalar_lea.vmem %s0, %s111
        $region24: #{downsample_maxpool2x2.1} parent=19 // pred_fallthru
          _
      $region20: #{downsample_maxpool2x2.1} parent=5 // pred_fallthru
        _
      %p113 = scmp.le.s32.totalorder 1, %s11
      %p114 = scmp.lt.s32.totalorder %s11, 9
      %p115 = pnand %p113, %p114
      %p116 = pneg %p115
      // Predicated region
      $region25: #{downsample_maxpool2x2.1} parent=5 // pred_check
        _
      $region26: #{downsample_maxpool2x2.1} parent=5 // pred_check_branch
        %118 = sbr.rel (%p115) target = $region28
      $region27: #{downsample_maxpool2x2.1} parent=5 // pred_region
        %s119 = ssub.s32 %s11, 1
        %p120 = scmp.lt.s32.totalorder %s16, 7
        %s121 = scalar_select %p120, %s16, 7
        %s122 = smul.addr %s121, 8
        %s123 = scalar_lea.vmem %s0, %s122
        %p124 = pneg %p37
        %p125 = pneg %p34
        %p126 = pneg %p58
        %p127 = pneg %p55
        %p128 = pneg %p84
        %p129 = pneg %p81
        %s130 = sand.u32 %s71, 1
        %s131 = scalar_lea.sflag [#allocation3], %s130
        %s132 = sand.u32 %s71, 1
        %s133 = smul.addr %s132, 8
        %s134 = scalar_lea.vmem [#allocation2], %s133
        %p135 = scmp.lt.s32.totalorder %s16, 7
        %s136 = scalar_select %p135, %s16, 7
        %s137 = smul.addr %s136, 8
        %s138 = scalar_lea.vmem %s0, %s137
        %v139 = vld [vmem:[%s138] sm:$0xff]
        %141 = vrot.lane.b32.xlu0 %v139, 112
        %v142 = vpop.permute.xlu0 %141
        %v144 = vmax.f32 %v139, %v142
        %146 = vrot.lane.b32.xlu0 %v144, 127
        %v147 = vpop.permute.xlu0 %146
        %v149 = vmax.f32 %v144, %v147
        %v150 = vld [vmem:[%s1] sm:$0xff]
        %v151 = vld [vmem:[%s1 + $0x8] sm:$0x7f]
        %vm152 = vcmask 121856
        %v154 = vsel %vm152, %v149, 0
        %vm156 = vcmask 1046528
        %v158 = vsel %vm156, %v151, 0
        %160 = vmatprep.subr.mxu0 0.0
        %161 = vmatpush1.msra.mxu0 0.0
        %162 = vmatprep.subr.mxu0 0.0
        %163 = vmatpush1.msra.mxu0 0.0
        %164 = vmatprep.subr.mxu0 0.0
        %165 = vmatpush1.msra.mxu0 0.0
        %166 = vmatprep.subr.mxu0 0.0
        %167 = vmatpush1.msra.mxu0 0.0
        %168 = vmatprep.subr.mxu0 0.0
        %169 = vmatpush1.msra.mxu0 0.0
        %170 = vmatprep.subr.mxu0 0.0
        %171 = vmatpush1.msra.mxu0 0.0
        %172 = vmatprep.subr.mxu0 0.0
        %173 = vmatpush1.msra.mxu0 0.0
        %174 = vmatprep.subr.mxu0 0.0
        %175 = vmatpush1.msra.mxu0 0.0
        %176 = vmatprep.subr.mxu0 0.0
        %177 = vmatpush1.msra.mxu0 0.0
        %178 = vmatprep.subr.mxu0 0.0
        %179 = vmatpush1.msra.mxu0 0.0
        %180 = vmatprep.subr.mxu0 0.0
        %181 = vmatpush1.msra.mxu0 0.0
        %182 = vmatprep.subr.mxu0 0.0
        %183 = vmatpush1.msra.mxu0 0.0
        %184 = vmatprep.subr.mxu0 0.0
        %185 = vmatpush1.msra.mxu0 0.0
        %186 = vmatprep.subr.mxu0 0.0
        %187 = vmatpush1.msra.mxu0 0.0
        %188 = vmatprep.subr.mxu0 0.0
        %189 = vmatpush1.msra.mxu0 %v158
        %190 = vmatprep.subr.mxu0 0.0
        %191 = vmatpush1.msra.mxu0 %v150
        %192 = vmatprep.subr.mxu0 0.0
        %193 = vmatpush2.msra.mxu0 0.0
        %194 = vmatprep.subr.mxu0 0.0
        %195 = vmatpush2.msra.mxu0 0.0
        %196 = vmatprep.subr.mxu0 0.0
        %197 = vmatpush2.msra.mxu0 0.0
        %198 = vmatprep.subr.mxu0 0.0
        %199 = vmatpush2.msra.mxu0 0.0
        %200 = vmatprep.subr.mxu0 0.0
        %201 = vmatpush2.msra.mxu0 0.0
        %202 = vmatprep.subr.mxu0 0.0
        %203 = vmatpush2.msra.mxu0 0.0
        %204 = vmatprep.subr.mxu0 0.0
        %205 = vmatpush2.msra.mxu0 0.0
        %206 = vmatprep.subr.mxu0 0.0
        %207 = vmatpush2.msra.mxu0 0.0
        %208 = vmatprep.subr.mxu0 0.0
        %209 = vmatpush2.msra.mxu0 0.0
        %210 = vmatprep.subr.mxu0 0.0
        %211 = vmatpush2.msra.mxu0 0.0
        %212 = vmatprep.subr.mxu0 0.0
        %213 = vmatpush2.msra.mxu0 0.0
        %214 = vmatprep.subr.mxu0 0.0
        %215 = vmatpush2.msra.mxu0 0.0
        %216 = vmatprep.subr.mxu0 0.0
        %217 = vmatpush2.msra.mxu0 0.0
        %218 = vmatprep.subr.mxu0 0.0
        %219 = vmatpush2.msra.mxu0 0.0
        %220 = vmatprep.subr.mxu0 0.0
        %221 = vmatpush2.msra.mxu0 0.0
        %222 = vmatprep.subr.mxu0 0.0
        %223 = vmatpush2.msra.mxu0 0.0
        %224 = vmatprep.mubr.f32.mxu0 0.0
        %225 = vmatmul.mubr.f32.gmra.mxu0 %v154
        %v226 = vpop.f32.mrf.mxu0
        %v227 = vadd.f32 0.0, %v226
        %v228 = vpop.f32.mrf.mxu0
        %229 = vdwg.mxu0
        %vm230 = vcmask 64512
        %231 = vst.msk [vmem:[%s134] sm:$0xff] %vm230, %v227
        %s232 = sand.u32 %s71, 1
        %s233 = scalar_lea.sflag [#allocation3], %s232
        %s234 = sand.u32 %s71, 1
        %s235 = smul.addr %s234, 8
        %s236 = scalar_lea.vmem [#allocation2], %s235
        // Predicated region
        $region29: #{downsample_maxpool2x2.1} parent=27 // pred_check
          %p237 = pneg %p81
        $region30: #{downsample_maxpool2x2.1} parent=27 // pred_check_branch
          %239 = sbr.rel (%p237) target = $region32
        $region31: #{downsample_maxpool2x2.1} parent=27 // pred_region
          %s241 = ssub.s32 128, 128
          %242 = vsyncadd %s233, %s241
          %s243 = smul.addr %s16, 128
          %s244 = scalar_lea.hbm %s2, %s243
          %s246 = sshll.u32 %s236, 4
          %s247 = int_to_ptr.vmem [resolvable:$true] %s246
          %249 = dma.vmem_to_hbm [thread:$0]  %s247, 128, %s244, %s233
        $region32: #{downsample_maxpool2x2.1} parent=27 // pred_fallthru
          _
      $region28: #{downsample_maxpool2x2.1} parent=5 // pred_fallthru
        _
      %p250 = scmp.le.s32.totalorder 2, %s11
      // Predicated region
      $region33: #{downsample_maxpool2x2.1} parent=5 // pred_check
        %p251 = pneg %p250
      $region34: #{downsample_maxpool2x2.1} parent=5 // pred_check_branch
        %253 = sbr.rel (%p251) target = $region36
      $region35: #{downsample_maxpool2x2.1} parent=5 // pred_region
        %s254 = ssub.s32 %s11, 2
        // Predicated region
        $region37: #{downsample_maxpool2x2.1} parent=35 // pred_check
          %p255 = pneg %p87
        $region38: #{downsample_maxpool2x2.1} parent=35 // pred_check_branch
          %257 = sbr.rel (%p255) target = $region40
        $region39: #{downsample_maxpool2x2.1} parent=35 // pred_region
          %s258 = sand.u32 %s72, 1
          %s259 = scalar_lea.sflag [#allocation3], %s258
          %s260 = sand.u32 %s72, 1
          %s261 = smul.addr %s260, 8
          %s262 = scalar_lea.vmem [#allocation2], %s261
          %263 = dma.done %s259, 128
        $region40: #{downsample_maxpool2x2.1} parent=35 // pred_fallthru
          _
      $region36: #{downsample_maxpool2x2.1} parent=5 // pred_fallthru
        _
    $region6: #{downsample_maxpool2x2.1} parent=1 // loop_footer
      %s15 = sadd.s32 1, %s11
    $region7: #{downsample_maxpool2x2.1} parent=1 // loop_footer_branch
      %10 = sbr.rel target = $region3
    $region8: #{downsample_maxpool2x2.1} parent=1 // loop_exit
      _
    %264 = vsyncpa [#allocation3], 1
    %s265 = scalar_lea.sflag [#allocation3], 1
    %266 = vsyncpa %s265, 1

</llo_original>
